<compile_context>
chip_gen: v7x
topology: tpu7x:2x2x1
jax: 0.10.0
libtpu: 0.0.40
codegen_flags: <defaults>
</compile_context>

<pallas_src>
import functools

import numpy as np
import jax
import jax.numpy as jnp
from jax.experimental import pallas as pl
from jax.experimental.pallas import tpu as pltpu


def _dsu_kernel(x_ref, eps_mu_ref, eps_std_ref, o_ref, *, eps, factor):
    """x_ref/o_ref: (N, c_blk, HW) native dtype; eps_*_ref: (N, c_blk, 1) f32."""
    n = x_ref.shape[0]
    hw = x_ref.shape[-1]

    # Cast to f32 on the VMEM tile (I/O stays in the native dtype).
    x = x_ref[...].astype(jnp.float32)

    # --- two-pass spatial statistics (matches PyTorch unbiased var) --------
    mean = jnp.mean(x, axis=-1, keepdims=True)                 # (N, c_blk, 1)
    d = x - mean                                               # centered tile
    var = jnp.sum(d * d, axis=-1, keepdims=True) * (1.0 / (hw - 1))
    std = jnp.sqrt(var + eps)                                  # (N, c_blk, 1)

    def batch_sqrtvar(t):                                      # t: (N, c_blk, 1)
        mu = jnp.mean(t, axis=0, keepdims=True)
        dv = t - mu
        v = jnp.sum(dv * dv, axis=0, keepdims=True) * (1.0 / (n - 1))
        return jnp.sqrt(v + eps)                               # (1, c_blk, 1)

    # Reparameterized style statistics; all (N, c_blk, 1) sized -> cheap.
    beta = mean + eps_mu_ref[...] * factor * batch_sqrtvar(mean)
    gamma = std + eps_std_ref[...] * factor * batch_sqrtvar(std)

    # (x - mean)/std * gamma + beta  ==  d * (gamma/std) + beta
    scale = gamma / std                                        # (N, c_blk, 1)
    o_ref[...] = (d * scale + beta).astype(o_ref.dtype)


def _round_up(x, m):
    return -(-x // m) * m


def _vmem_budget():
    """Returns (physical VMEM capacity, scoped VMEM limit to request) bytes."""
    try:
        cap = int(pltpu.get_tpu_info().vmem_capacity_bytes)
    except Exception:
        cap = 64 << 20            # conservative fallback: v7x has 64 MiB / TC
    return cap, int(cap * 0.6)    # ~38 MiB on v7x, ~77 MiB on v5e/v6e


def _choose_c_block(N, C, HW, itemsize, tile_target_bytes):
    """Channel block size.

    c_blk is a multiple of the dtype's sublane packing (8 for f32, 16 for
    bf16, 32 for 8-bit dtypes) or equal to C (full extent is always legal).
    It is sized so one (N, c_blk, HW) tile stays under `tile_target_bytes`
    (2 in + 2 out pipeline buffers plus f32 working tiles must fit the scoped
    VMEM limit), preferring >= 2 (even) grid steps so both v7x TensorCores
    get work under dimension_semantics=("parallel",).
    """
    sub = max(8, 32 // itemsize)              # f32: 8, bf16: 16, 8-bit: 32
    if C <= sub:
        return C                              # full extent: only legal choice
    bytes_per_c = max(1, N * HW * itemsize)
    fit = max(sub, (tile_target_bytes // bytes_per_c) // sub * sub)
    # TODO(synk): if even `sub` channels overflow VMEM (huge N*H*W), the HW
    # axis would need tiling + multi-step stats accumulation; not needed for
    # typical DSU feature-map sizes.
    n_blocks = max(2, -(-C // fit))           # >= 2 blocks for megacore/v7x
    if n_blocks % 2:
        n_blocks += 1                         # even split balances the 2 TCs
    c_blk = _round_up(-(-C // n_blocks), sub)
    return C if c_blk >= C else c_blk         # never exceeds `fit` (see notes)


def distribution_uncertainty_kernel(x_nchw, eps_mu, eps_std, *,
                                    eps=1e-6, factor=1.0):
    """Active (perturbing) path of DistributionUncertainty.forward.

    x_nchw          : (N, C, H, W), any float dtype (kept native end-to-end)
    eps_mu, eps_std : (N, C) standard-normal draws (torch.randn_like(mean/std))
    Returns an array with x's shape and dtype.
    """
    N, C, H, W = x_nchw.shape
    HW = H * W
    if HW < 2 or N < 2:
        # PyTorch's unbiased variance would yield NaN here; fail loudly instead.
        raise ValueError("DistributionUncertainty needs H*W >= 2 and N >= 2 "
                         f"(got N={N}, H*W={HW}).")

    dtype = x_nchw.dtype
    itemsize = jnp.dtype(dtype).itemsize

    # TODO(synk): for small, non-128-aligned H*W (e.g. 49/196) on v7x a
    # lane-dense (N, HW, C) layout would improve lane occupancy, but only if
    # the producer already emits NHWC (an extra transpose pass negates it).
    x3 = x_nchw.reshape(N, C, HW)                    # native dtype, no convert
    # (N, C, 1): lane dim is the full extent 1, so (N, c_blk, 1) blocks are
    # legal for any multiple-of-8 c_blk.
    eps_mu3 = eps_mu.astype(jnp.float32).reshape(N, C, 1)
    eps_std3 = eps_std.astype(jnp.float32).reshape(N, C, 1)

    vmem_cap, vmem_limit = _vmem_budget()
    c_blk = _choose_c_block(N, C, HW, itemsize,
                            tile_target_bytes=vmem_limit // 10)
    grid = (pl.cdiv(C, c_blk),)

    # Budget: 2-deep in + out pipeline buffers (native dtype) + ~2 f32 working
    # tiles inside the kernel + compiler-internal scratch headroom.
    tile_elems = N * c_blk * HW
    need = 4 * tile_elems * itemsize + 2 * tile_elems * 4 + (2 << 20)
    vmem_limit = min(int(vmem_cap * 0.9), max(vmem_limit, need))

    kernel = functools.partial(_dsu_kernel, eps=float(eps), factor=float(factor))

    out3 = pl.pallas_call(
        kernel,
        out_shape=jax.ShapeDtypeStruct((N, C, HW), dtype),
        grid_spec=pltpu.PrefetchScalarGridSpec(
            num_scalar_prefetch=0,
            grid=grid,
            in_specs=[
                pl.BlockSpec((N, c_blk, HW), lambda c: (0, c, 0)),
                pl.BlockSpec((N, c_blk, 1), lambda c: (0, c, 0)),
                pl.BlockSpec((N, c_blk, 1), lambda c: (0, c, 0)),
            ],
            out_specs=pl.BlockSpec((N, c_blk, HW), lambda c: (0, c, 0)),
        ),
        compiler_params=pltpu.CompilerParams(
            dimension_semantics=("parallel",),   # shard channel blocks over TCs
            vmem_limit_bytes=int(vmem_limit),
        ),
        # x (operand 0) and the output have identical shape/dtype and each tile
        # is fully read before its output tile is written: alias so XLA can
        # reuse/donate x's HBM buffer (XLA copies if x is still live).
        input_output_aliases={0: 0},
    )(x3, eps_mu3, eps_std3)

    return out3.reshape(N, C, H, W)


def distribution_uncertainty_forward(x_nchw, key, *, p=0.5, eps=1e-6,
                                     factor=1.0, training=True, rng=None):
    """Full forward, including the host-side probabilistic gate.

    Mirrors PyTorch's `np.random.random() > self.p` gate; it is host-side
    Python and therefore not jittable by design (matches the reference module).
    """
    # TODO(synk): the np.random p-gate is inherently host-side / non-traced.
    draw = rng.random() if rng is not None else np.random.random()
    if (not training) or (draw > p):
        return x_nchw
    N, C = x_nchw.shape[0], x_nchw.shape[1]
    k_mu, k_std = jax.random.split(key)
    eps_mu = jax.random.normal(k_mu, (N, C), dtype=jnp.float32)
    eps_std = jax.random.normal(k_std, (N, C), dtype=jnp.float32)
    return distribution_uncertainty_kernel(x_nchw, eps_mu, eps_std,
                                           eps=eps, factor=factor)


def _reference(x, eps_mu, eps_std, *, eps=1e-6, factor=1.0):
    # Pure-JAX reference reproducing the PyTorch math (unbiased variance).
    x = x.astype(jnp.float32)
    mean = x.mean(axis=(2, 3))
    std = jnp.sqrt(x.var(axis=(2, 3), ddof=1) + eps)
    sv_mu = jnp.sqrt(mean.var(axis=0, ddof=1) + eps)[None, :]
    sv_std = jnp.sqrt(std.var(axis=0, ddof=1) + eps)[None, :]
    beta = mean + eps_mu * factor * sv_mu
    gamma = std + eps_std * factor * sv_std
    xn = (x - mean[:, :, None, None]) / std[:, :, None, None]
    return xn * gamma[:, :, None, None] + beta[:, :, None, None]


if __name__ == "__main__":
    key = jax.random.PRNGKey(0)
    kx, k_mu, k_std, kx2 = jax.random.split(key, 4)

    # --- small f32 case (single channel block, full-extent C) --------------
    N, C, H, W = 2, 4, 16, 16
    x = jax.random.normal(kx, (N, C, H, W), dtype=jnp.float32) * 2.0 + 0.5
    eps_mu = jax.random.normal(k_mu, (N, C), dtype=jnp.float32)
    eps_std = jax.random.normal(k_std, (N, C), dtype=jnp.float32)

    ref = np.asarray(_reference(x, eps_mu, eps_std, eps=1e-6, factor=1.0))
    out = jax.block_until_ready(
        distribution_uncertainty_kernel(x, eps_mu, eps_std, eps=1e-6, factor=1.0))
    assert out.shape == x.shape and out.dtype == x.dtype
    np.testing.assert_allclose(np.asarray(out), ref, rtol=1e-4, atol=2e-4)

    # --- multi-block grid with a padded trailing channel block (C=20) ------
    N2, C2, H2, W2 = 4, 20, 8, 8
    x2 = jax.random.normal(kx2, (N2, C2, H2, W2), dtype=jnp.float32) - 3.0
    e2m = jax.random.normal(jax.random.fold_in(k_mu, 1), (N2, C2), jnp.float32)
    e2s = jax.random.normal(jax.random.fold_in(k_std, 1), (N2, C2), jnp.float32)
    ref2 = np.asarray(_reference(x2, e2m, e2s))
    out2 = jax.block_until_ready(distribution_uncertainty_kernel(x2, e2m, e2s))
    assert out2.shape == x2.shape and out2.dtype == x2.dtype
    np.testing.assert_allclose(np.asarray(out2), ref2, rtol=1e-4, atol=2e-4)

    # --- bf16 I/O path (native dtype end-to-end, f32 math inside) ----------
    xb = x2.astype(jnp.bfloat16)
    refb = np.asarray(_reference(xb, e2m, e2s))
    outb = jax.block_until_ready(distribution_uncertainty_kernel(xb, e2m, e2s))
    assert outb.shape == xb.shape and outb.dtype == jnp.bfloat16
    np.testing.assert_allclose(np.asarray(outb, dtype=np.float32), refb,
                               rtol=3e-2, atol=2e-1)

    # --- exercise the full forward (gate + kernel); p=1.0 always fires -----
    rng = np.random.default_rng(0)
    out_fwd = distribution_uncertainty_forward(x, k_mu, p=1.0, training=True,
                                               rng=rng)
    jax.block_until_ready(out_fwd)
    assert out_fwd.shape == x.shape

    print("KERNEL_OK")
</pallas_src>

<mosaic_0001>
module attributes {stable_mosaic.version = 11 : i64} {
  func.func @_dsu_kernel(%arg0: i32, %arg1: memref<2x4x256xf32, #tpu.memory_space<vmem>>, %arg2: memref<2x4x1xf32, #tpu.memory_space<vmem>>, %arg3: memref<2x4x1xf32, #tpu.memory_space<vmem>>, %arg4: memref<2x4x256xf32, #tpu.memory_space<vmem>>) attributes {dimension_semantics = [#tpu.dimension_semantics<parallel>], iteration_bounds = array<i64: 1>, scalar_prefetch = 0 : i64, scratch_operands = 0 : i64, tpu.core_type = #tpu.core_type<tc>, window_params = [{transform_indices = @transform_0, window_bounds = array<i64: 2, 4, 256>}, {transform_indices = @transform_1, window_bounds = array<i64: 2, 4, 1>}, {transform_indices = @transform_2, window_bounds = array<i64: 2, 4, 1>}, {transform_indices = @transform_3, window_bounds = array<i64: 2, 4, 256>}]} {
    %c0 = arith.constant 0 : index
    %c0_0 = arith.constant 0 : index
    %c0_1 = arith.constant 0 : index
    %0 = vector.load %arg1[%c0, %c0_0, %c0_1] : memref<2x4x256xf32, #tpu.memory_space<vmem>>, vector<2x4x256xf32>
    %cst = arith.constant dense<0.000000e+00> : vector<2x4xf32>
    %1 = vector.multi_reduction <add>, %0, %cst [2] : vector<2x4x256xf32> to vector<2x4xf32>
    %2 = vector.shape_cast %1 : vector<2x4xf32> to vector<2x4x1xf32>
    %cst_2 = arith.constant 2.560000e+02 : f32
    %3 = vector.broadcast %cst_2 : f32 to vector<2x4x1xf32>
    %4 = arith.divf %2, %3 : vector<2x4x1xf32>
    %5 = vector.broadcast %4 : vector<2x4x1xf32> to vector<2x4x256xf32>
    %6 = arith.subf %0, %5 : vector<2x4x256xf32>
    %7 = arith.mulf %6, %6 : vector<2x4x256xf32>
    %cst_3 = arith.constant dense<0.000000e+00> : vector<2x4xf32>
    %8 = vector.multi_reduction <add>, %7, %cst_3 [2] : vector<2x4x256xf32> to vector<2x4xf32>
    %9 = vector.shape_cast %8 : vector<2x4xf32> to vector<2x4x1xf32>
    %cst_4 = arith.constant 0.00392156886 : f32
    %10 = vector.broadcast %cst_4 : f32 to vector<2x4x1xf32>
    %11 = arith.mulf %9, %10 : vector<2x4x1xf32>
    %cst_5 = arith.constant 9.99999997E-7 : f32
    %12 = vector.broadcast %cst_5 : f32 to vector<2x4x1xf32>
    %13 = arith.addf %11, %12 : vector<2x4x1xf32>
    %14 = math.sqrt %13 : vector<2x4x1xf32>
    %c0_6 = arith.constant 0 : index
    %c0_7 = arith.constant 0 : index
    %c0_8 = arith.constant 0 : index
    %15 = vector.load %arg2[%c0_6, %c0_7, %c0_8] : memref<2x4x1xf32, #tpu.memory_space<vmem>>, vector<2x4x1xf32>
    %cst_9 = arith.constant 1.000000e+00 : f32
    %16 = vector.broadcast %cst_9 : f32 to vector<2x4x1xf32>
    %17 = arith.mulf %15, %16 : vector<2x4x1xf32>
    %cst_10 = arith.constant dense<0.000000e+00> : vector<4x1xf32>
    %18 = vector.multi_reduction <add>, %4, %cst_10 [0] : vector<2x4x1xf32> to vector<4x1xf32>
    %19 = vector.shape_cast %18 : vector<4x1xf32> to vector<1x4x1xf32>
    %cst_11 = arith.constant 2.000000e+00 : f32
    %20 = vector.broadcast %cst_11 : f32 to vector<1x4x1xf32>
    %21 = arith.divf %19, %20 : vector<1x4x1xf32>
    %22 = vector.broadcast %21 : vector<1x4x1xf32> to vector<2x4x1xf32>
    %23 = arith.subf %4, %22 : vector<2x4x1xf32>
    %24 = arith.mulf %23, %23 : vector<2x4x1xf32>
    %cst_12 = arith.constant dense<0.000000e+00> : vector<4x1xf32>
    %25 = vector.multi_reduction <add>, %24, %cst_12 [0] : vector<2x4x1xf32> to vector<4x1xf32>
    %26 = vector.shape_cast %25 : vector<4x1xf32> to vector<1x4x1xf32>
    %cst_13 = arith.constant 1.000000e+00 : f32
    %27 = vector.broadcast %cst_13 : f32 to vector<1x4x1xf32>
    %28 = arith.mulf %26, %27 : vector<1x4x1xf32>
    %cst_14 = arith.constant 9.99999997E-7 : f32
    %29 = vector.broadcast %cst_14 : f32 to vector<1x4x1xf32>
    %30 = arith.addf %28, %29 : vector<1x4x1xf32>
    %31 = math.sqrt %30 : vector<1x4x1xf32>
    %32 = vector.broadcast %31 : vector<1x4x1xf32> to vector<2x4x1xf32>
    %33 = arith.mulf %17, %32 : vector<2x4x1xf32>
    %34 = arith.addf %4, %33 : vector<2x4x1xf32>
    %c0_15 = arith.constant 0 : index
    %c0_16 = arith.constant 0 : index
    %c0_17 = arith.constant 0 : index
    %35 = vector.load %arg3[%c0_15, %c0_16, %c0_17] : memref<2x4x1xf32, #tpu.memory_space<vmem>>, vector<2x4x1xf32>
    %cst_18 = arith.constant 1.000000e+00 : f32
    %36 = vector.broadcast %cst_18 : f32 to vector<2x4x1xf32>
    %37 = arith.mulf %35, %36 : vector<2x4x1xf32>
    %cst_19 = arith.constant dense<0.000000e+00> : vector<4x1xf32>
    %38 = vector.multi_reduction <add>, %14, %cst_19 [0] : vector<2x4x1xf32> to vector<4x1xf32>
    %39 = vector.shape_cast %38 : vector<4x1xf32> to vector<1x4x1xf32>
    %cst_20 = arith.constant 2.000000e+00 : f32
    %40 = vector.broadcast %cst_20 : f32 to vector<1x4x1xf32>
    %41 = arith.divf %39, %40 : vector<1x4x1xf32>
    %42 = vector.broadcast %41 : vector<1x4x1xf32> to vector<2x4x1xf32>
    %43 = arith.subf %14, %42 : vector<2x4x1xf32>
    %44 = arith.mulf %43, %43 : vector<2x4x1xf32>
    %cst_21 = arith.constant dense<0.000000e+00> : vector<4x1xf32>
    %45 = vector.multi_reduction <add>, %44, %cst_21 [0] : vector<2x4x1xf32> to vector<4x1xf32>
    %46 = vector.shape_cast %45 : vector<4x1xf32> to vector<1x4x1xf32>
    %cst_22 = arith.constant 1.000000e+00 : f32
    %47 = vector.broadcast %cst_22 : f32 to vector<1x4x1xf32>
    %48 = arith.mulf %46, %47 : vector<1x4x1xf32>
    %cst_23 = arith.constant 9.99999997E-7 : f32
    %49 = vector.broadcast %cst_23 : f32 to vector<1x4x1xf32>
    %50 = arith.addf %48, %49 : vector<1x4x1xf32>
    %51 = math.sqrt %50 : vector<1x4x1xf32>
    %52 = vector.broadcast %51 : vector<1x4x1xf32> to vector<2x4x1xf32>
    %53 = arith.mulf %37, %52 : vector<2x4x1xf32>
    %54 = arith.addf %14, %53 : vector<2x4x1xf32>
    %55 = arith.divf %54, %14 : vector<2x4x1xf32>
    %56 = vector.broadcast %55 : vector<2x4x1xf32> to vector<2x4x256xf32>
    %57 = arith.mulf %6, %56 : vector<2x4x256xf32>
    %58 = vector.broadcast %34 : vector<2x4x1xf32> to vector<2x4x256xf32>
    %59 = arith.addf %57, %58 : vector<2x4x256xf32>
    %c0_24 = arith.constant 0 : index
    %c0_25 = arith.constant 0 : index
    %c0_26 = arith.constant 0 : index
    %60 = vector.load %arg4[%c0_24, %c0_25, %c0_26] : memref<2x4x256xf32, #tpu.memory_space<vmem>>, vector<2x4x256xf32>
    tpu.vector_store %arg4[%c0_24, %c0_25, %c0_26], %59 {strides = array<i32>} : memref<2x4x256xf32, #tpu.memory_space<vmem>>, vector<2x4x256xf32>,
    return
  }
  func.func @transform_0(%arg0: i32) -> (i32, i32, i32) {
    %c0_i32 = arith.constant 0 : i32
    %c0_i32_0 = arith.constant 0 : i32
    %c0_i32_1 = arith.constant 0 : i32
    return %c0_i32, %arg0, %c0_i32_0 : i32, i32, i32
  }
  func.func @transform_1(%arg0: i32) -> (i32, i32, i32) {
    %c0_i32 = arith.constant 0 : i32
    %c0_i32_0 = arith.constant 0 : i32
    %c0_i32_1 = arith.constant 0 : i32
    return %c0_i32, %arg0, %c0_i32_0 : i32, i32, i32
  }
  func.func @transform_2(%arg0: i32) -> (i32, i32, i32) {
    %c0_i32 = arith.constant 0 : i32
    %c0_i32_0 = arith.constant 0 : i32
    %c0_i32_1 = arith.constant 0 : i32
    return %c0_i32, %arg0, %c0_i32_0 : i32, i32, i32
  }
  func.func @transform_3(%arg0: i32) -> (i32, i32, i32) {
    %c0_i32 = arith.constant 0 : i32
    %c0_i32_0 = arith.constant 0 : i32
    %c0_i32_1 = arith.constant 0 : i32
    return %c0_i32, %arg0, %c0_i32_0 : i32, i32, i32
  }
}

</mosaic_0001>

<llo_original>
// kernel: tpu_custom_call.1
$region0: #{tpu_custom_call.1}
  #allocation0 [shape = 'u32[]', space=smem, size = 0x4, offset = 0x4, fixed_abs, tag = 'smem constant byte address 0x4 - core index']
  #allocation1 [shape = 'u32[144,128]{1,0:T(1,128)}', space=vmem, size = 0x12000, scoped, tag = 'internal scratch']
  %s0 = inlined_call_operand.hbm [shape: f32[2,4,256], index: 0, kind: input, shape index: {}, may-alias: {0,3}]
  %s1 = inlined_call_operand.vmem [shape: f32[2,4,1], index: 1, kind: input, shape index: {}]
  %s2 = inlined_call_operand.vmem [shape: f32[2,4,1], index: 2, kind: input, shape index: {}]
  %s3 = inlined_call_operand.hbm [shape: f32[2,4,256], index: 3, kind: output, shape index: {}, may-alias: {0,3}]
  %s4 = sld [smem:[#allocation0]]
  $region26: #{tpu_custom_call.1} parent=0
    _
  %s6 = ssub.s32 1, %s4
  %s7 = scalar_select 0, %s6, %s4
  $region1: #{tpu_custom_call.1} parent=0
    #allocation2 [shape = 'u8[8192]{0}', space=vmem, size = 0x2000, scoped, tag = 'input window, operand 0, single buffered']
    #allocation3 [shape = 's32[1]{0}', space=sflag, size = 0x4, scoped, tag = 'scoped memory for tpu_custom_call.1']
    #allocation4 [shape = 's32[1]{0}', space=sflag, size = 0x4, scoped, tag = 'scoped memory for tpu_custom_call.1']
    #allocation5 [shape = 'u8[8192]{0}', space=vmem, size = 0x2000, scoped, tag = 'output window, operand 0, single buffered']
    %8 = vsyncpa [#allocation3], 0
    %9 = vsyncpa [#allocation4], 0
    // Predicated region
    $region2: #{tpu_custom_call.1} parent=1 // pred_check
      _
    $region3: #{tpu_custom_call.1} parent=1 // pred_check_branch
      %11 = sbr.rel (0) target = $region5
    $region4: #{tpu_custom_call.1} parent=1 // pred_region
      %s13 = ssub.s32 256, 256
      %14 = vsyncadd [#allocation3], %s13
      %s15 = sshll.u32 [#allocation2], 4
      %s16 = int_to_ptr.vmem [resolvable:$true] %s15
      %21 = dma.hbm_to_vmem [thread:$0]  %s0, 256, %s16, [#allocation3], 128, 128, 8
    $region5: #{tpu_custom_call.1} parent=1 // pred_fallthru
      _
    // Predicated region
    $region6: #{tpu_custom_call.1} parent=1 // pred_check
      _
    $region7: #{tpu_custom_call.1} parent=1 // pred_check_branch
      %23 = sbr.rel (0) target = $region9
    $region8: #{tpu_custom_call.1} parent=1 // pred_region
      _
    $region9: #{tpu_custom_call.1} parent=1 // pred_fallthru
      _
    // Predicated region
    $region10: #{tpu_custom_call.1} parent=1 // pred_check
      _
    $region11: #{tpu_custom_call.1} parent=1 // pred_check_branch
      %25 = sbr.rel (0) target = $region13
    $region12: #{tpu_custom_call.1} parent=1 // pred_region
      _
    $region13: #{tpu_custom_call.1} parent=1 // pred_fallthru
      _
    // Predicated region
    $region14: #{tpu_custom_call.1} parent=1 // pred_check
      _
    $region15: #{tpu_custom_call.1} parent=1 // pred_check_branch
      %27 = sbr.rel (0) target = $region17
    $region16: #{tpu_custom_call.1} parent=1 // pred_region
      %28 = dma.done [#allocation3], 256
    $region17: #{tpu_custom_call.1} parent=1 // pred_fallthru
      _
    %v29 = vld [vmem:[#allocation2] sm:$0xff]
    %v30 = vld [vmem:[#allocation2 + $0x8] sm:$0xff]
    %v33 = vcombine.high %v29, %v29
    %v34 = vcombine.high %v30, %v30
    %vm37 = vcmask 1043456
    %v38 = vsel %vm37, %v29, 0.0
    %v39 = vsel %vm37, %v33, 0.0
    %v40 = vadd.f32 %v38, %v39
    %41 = vadd.xlane.f32.xlu0 %v40
    %v42 = vpop.xlane.xlu0 %41
    %v43 = vsel %vm37, %v30, 0.0
    %v44 = vsel %vm37, %v34, 0.0
    %v45 = vadd.f32 %v43, %v44
    %46 = vadd.xlane.f32.xlu0 %v45
    %v47 = vpop.xlane.xlu0 %46
    %v48 = vrcp.pop 256.0
    %v49 = vmul.f32 %v42, %v48
    %v50 = vmul.f32 %v47, %v48
    %v54 = vunpack.c.l.s4 839922192
    %v55 = vunpack.c.0.s8 %v54
    %v56 = vlaneseq
    %v57 = vshrl.u32 %v56, 7
    %v58 = vsub.s32 %v55, %v57
    %v59 = vrot.slane %v49, %v58
    %v61 = vunpack.c.l.s4 839922192
    %v62 = vunpack.c.0.s8 %v61
    %v63 = vlaneseq
    %v64 = vshrl.u32 %v63, 7
    %v65 = vsub.s32 %v62, %v64
    %v66 = vrot.slane %v50, %v65
    %v69 = vsub.f32 %v29, %v59
    %v70 = vsub.f32 %v30, %v66
    %v71 = vmul.f32 %v69, %v69
    %v72 = vmul.f32 %v70, %v70
    %v75 = vcombine.high %v71, %v71
    %v76 = vcombine.high %v72, %v72
    %v79 = vsel %vm37, %v71, 0.0
    %v80 = vsel %vm37, %v75, 0.0
    %v81 = vadd.f32 %v79, %v80
    %82 = vadd.xlane.f32.xlu0 %v81
    %v83 = vpop.xlane.xlu0 %82
    %v84 = vsel %vm37, %v72, 0.0
    %v85 = vsel %vm37, %v76, 0.0
    %v86 = vadd.f32 %v84, %v85
    %87 = vadd.xlane.f32.xlu0 %v86
    %v88 = vpop.xlane.xlu0 %87
    %v89 = vmul.f32 %v83, 0.003921569
    %v90 = vmul.f32 %v88, 0.003921569
    %v91 = vadd.f32 %v89, 1e-06
    %v92 = vadd.f32 %v90, 1e-06
    %v93 = vrsqrt.pop %v91
    %v94 = vmul.f32 %v91, %v93
    %vm95 = vcmp.eq.f32.partialorder %v91, inf
    %v96 = vsel %vm95, %v91, %v94
    %vm97 = vcmp.eq.f32.partialorder %v91, 0.0
    %v98 = vand.u32 %v91, 2147483648
    %v99 = vsel %vm97, %v98, %v96
    %v100 = vrsqrt.pop %v92
    %v101 = vmul.f32 %v92, %v100
    %vm102 = vcmp.eq.f32.partialorder %v92, inf
    %v103 = vsel %vm102, %v92, %v101
    %vm104 = vcmp.eq.f32.partialorder %v92, 0.0
    %v105 = vand.u32 %v92, 2147483648
    %v106 = vsel %vm104, %v105, %v103
    %v107 = vld [vmem:[%s1] sm:$0xf]
    %v108 = vld [vmem:[%s1 + $0x4] sm:$0xf]
    %v109 = vsel %vm37, %v49, 0.0
    %v110 = vsel %vm37, %v50, 0.0
    %v111 = vadd.f32 %v109, %v110
    %v112 = vrcp.pop 2.0
    %v113 = vmul.f32 %v111, %v112
    %v114 = vsub.f32 %v49, %v113
    %v115 = vsub.f32 %v50, %v113
    %v116 = vmul.f32 %v114, %v114
    %v117 = vmul.f32 %v115, %v115
    %v118 = vsel %vm37, %v116, 0.0
    %v119 = vsel %vm37, %v117, 0.0
    %v120 = vadd.f32 %v118, %v119
    %v121 = vadd.f32 %v120, 1e-06
    %v122 = vrsqrt.pop %v121
    %v123 = vmul.f32 %v121, %v122
    %vm124 = vcmp.eq.f32.partialorder %v121, inf
    %v125 = vsel %vm124, %v121, %v123
    %vm126 = vcmp.eq.f32.partialorder %v121, 0.0
    %v127 = vand.u32 %v121, 2147483648
    %v128 = vsel %vm126, %v127, %v125
    %v129 = vmul.f32 %v107, %v128
    %v130 = vmul.f32 %v108, %v128
    %v131 = vadd.f32 %v49, %v129
    %v132 = vadd.f32 %v50, %v130
    %v133 = vld [vmem:[%s2] sm:$0xf]
    %v134 = vld [vmem:[%s2 + $0x4] sm:$0xf]
    %v135 = vsel %vm37, %v99, 0.0
    %v136 = vsel %vm37, %v106, 0.0
    %v137 = vadd.f32 %v135, %v136
    %v138 = vmul.f32 %v137, %v112
    %v139 = vsub.f32 %v99, %v138
    %v140 = vsub.f32 %v106, %v138
    %v141 = vmul.f32 %v139, %v139
    %v142 = vmul.f32 %v140, %v140
    %v143 = vsel %vm37, %v141, 0.0
    %v144 = vsel %vm37, %v142, 0.0
    %v145 = vadd.f32 %v143, %v144
    %v146 = vadd.f32 %v145, 1e-06
    %v147 = vrsqrt.pop %v146
    %v148 = vmul.f32 %v146, %v147
    %vm149 = vcmp.eq.f32.partialorder %v146, inf
    %v150 = vsel %vm149, %v146, %v148
    %vm151 = vcmp.eq.f32.partialorder %v146, 0.0
    %v152 = vand.u32 %v146, 2147483648
    %v153 = vsel %vm151, %v152, %v150
    %v154 = vmul.f32 %v133, %v153
    %v155 = vmul.f32 %v134, %v153
    %v156 = vadd.f32 %v99, %v154
    %v157 = vadd.f32 %v106, %v155
    %v158 = vrcp.pop %v99
    %v159 = vmul.f32 %v156, %v158
    %v160 = vrcp.pop %v106
    %v161 = vmul.f32 %v157, %v160
    %163 = vset.pattern.permute.xlu0 0
    %164 = vperm.xlu0 %163, %v159
    %v165 = vpop.permute.xlu0 %164
    %167 = vset.pattern.permute.xlu0 0
    %168 = vperm.xlu0 %167, %v161
    %v169 = vpop.permute.xlu0 %168
    %v171 = vunpack.c.l.s4 839922192
    %v172 = vunpack.c.0.s8 %v171
    %v173 = vlaneseq
    %v174 = vshrl.u32 %v173, 7
    %v175 = vsub.s32 %v172, %v174
    %v176 = vrot.slane %v165, %v175
    %v178 = vunpack.c.l.s4 839922192
    %v179 = vunpack.c.0.s8 %v178
    %v180 = vlaneseq
    %v181 = vshrl.u32 %v180, 7
    %v182 = vsub.s32 %v179, %v181
    %v183 = vrot.slane %v169, %v182
    %v186 = vmul.f32 %v69, %v176
    %v187 = vmul.f32 %v70, %v183
    %189 = vset.pattern.permute.xlu0 0
    %190 = vperm.xlu0 %189, %v131
    %v191 = vpop.permute.xlu0 %190
    %193 = vset.pattern.permute.xlu0 0
    %194 = vperm.xlu0 %193, %v132
    %v195 = vpop.permute.xlu0 %194
    %v197 = vunpack.c.l.s4 839922192
    %v198 = vunpack.c.0.s8 %v197
    %v199 = vlaneseq
    %v200 = vshrl.u32 %v199, 7
    %v201 = vsub.s32 %v198, %v200
    %v202 = vrot.slane %v191, %v201
    %v204 = vunpack.c.l.s4 839922192
    %v205 = vunpack.c.0.s8 %v204
    %v206 = vlaneseq
    %v207 = vshrl.u32 %v206, 7
    %v208 = vsub.s32 %v205, %v207
    %v209 = vrot.slane %v195, %v208
    %v212 = vadd.f32 %v186, %v202
    %v213 = vadd.f32 %v187, %v209
    %214 = vst [vmem:[#allocation5] sm:$0xff] %v212
    %215 = vst [vmem:[#allocation5 + $0x8] sm:$0xff] %v213
    // Predicated region
    $region18: #{tpu_custom_call.1} parent=1 // pred_check
      _
    $region19: #{tpu_custom_call.1} parent=1 // pred_check_branch
      %217 = sbr.rel (0) target = $region21
    $region20: #{tpu_custom_call.1} parent=1 // pred_region
      %s219 = ssub.s32 256, 256
      %220 = vsyncadd [#allocation4], %s219
      %s221 = sshll.u32 [#allocation5], 4
      %s222 = int_to_ptr.vmem [resolvable:$true] %s221
      %227 = dma.vmem_to_hbm [thread:$0]  %s222, 256, %s3, [#allocation4], 128, 128, 8
    $region21: #{tpu_custom_call.1} parent=1 // pred_fallthru
      _
    // Predicated region
    $region22: #{tpu_custom_call.1} parent=1 // pred_check
      _
    $region23: #{tpu_custom_call.1} parent=1 // pred_check_branch
      %229 = sbr.rel (0) target = $region25
    $region24: #{tpu_custom_call.1} parent=1 // pred_region
      %230 = dma.done [#allocation4], 256
    $region25: #{tpu_custom_call.1} parent=1 // pred_fallthru
      _
    %231 = vsyncpa [#allocation3], 1
    %232 = vsyncpa [#allocation4], 1

</llo_original>
